<compile_context>
chip_gen: v5e
topology: v5e:2x2
jax: 0.10.0
libtpu: 0.0.40
codegen_flags: <defaults>
</compile_context>

<pallas_src>
import functools

import numpy as np

import jax
import jax.numpy as jnp
from jax import lax
from jax.experimental import pallas as pl
from jax.experimental.pallas import tpu as pltpu


def _round_up(n, m):
    return ((n + m - 1) // m) * m


# ---------------------------------------------------------------------------
# Register-resident path: whole hoisted projection lives in vregs (small T).
# ---------------------------------------------------------------------------
def rnn_fused_reg_kernel(x_ref, w_ih_ref, w_hh_ref, b_ref, w_fc_ref, b_fc_ref,
                         out_ref):
    """Fused RNN forward, no scratch.

    x_ref:    (T*Bp, I)  time-major, batch-padded, flattened input
    w_ih_ref: (I, Hp)    padded, pre-transposed input->hidden weights
    w_hh_ref: (Hp, Hp)   padded, pre-transposed hidden->hidden weights
    b_ref:    (1, Hp)    b_ih + b_hh, padded, f32
    w_fc_ref: (Hp, Op)   padded, pre-transposed fc weights
    b_fc_ref: (1, Op)    padded fc bias, f32
    out_ref:  (Bp, Op)   lane-dense output block (sliced in the wrapper)
    """
    Hp = w_hh_ref.shape[0]
    Bp = out_ref.shape[0]
    T = x_ref.shape[0] // Bp
    mxu_dtype = w_hh_ref.dtype  # f32, or bf16 on v6e/v7x (wrapper choice)

    # Hoisted input projection: ONE MXU matmul over all timesteps plus the
    # pre-summed bias; kept as a value (T*Bp*Hp elems = a few vregs here), so
    # it never round-trips VMEM.  Accumulation stays f32.
    xw = (jnp.dot(x_ref[...], w_ih_ref[...],
                  preferred_element_type=jnp.float32) + b_ref[...])

    # Loop-invariant MXU RHS, hoisted out of the recurrence.
    # TODO(synk): if the bundle dump shows the 128x128 W_hh tile being
    # re-pushed every timestep, drive the MXU explicitly instead
    # (pltpu.matmul_push_rhs once, pltpu.matmul_acc_lhs / matmul_pop per step)
    # so the RHS stays latched across the serial chain.
    w_hh = w_hh_ref[...]

    h = jnp.zeros((Bp, Hp), jnp.float32)
    for t in range(T):  # fully static: xw slices are aligned vreg row-groups
        hh = jnp.dot(h.astype(mxu_dtype), w_hh,
                     preferred_element_type=jnp.float32)
        h = jnp.tanh(xw[t * Bp:(t + 1) * Bp, :] + hh)

    out_ref[...] = (jnp.dot(h.astype(mxu_dtype), w_fc_ref[...],
                            preferred_element_type=jnp.float32)
                    + b_fc_ref[...]).astype(out_ref.dtype)


# ---------------------------------------------------------------------------
# VMEM-scratch path: larger T*Bp*Hp, capped unroll to avoid vreg spills.
# ---------------------------------------------------------------------------
def rnn_fused_scratch_kernel(x_ref, w_ih_ref, w_hh_ref, b_ref, w_fc_ref,
                             b_fc_ref, out_ref, xw_scratch, *, unroll):
    T, Bp, Hp = xw_scratch.shape
    mxu_dtype = w_hh_ref.dtype

    xw = (jnp.dot(x_ref[...], w_ih_ref[...],
                  preferred_element_type=jnp.float32) + b_ref[...])
    xw_scratch[...] = xw.reshape(T, Bp, Hp)

    w_hh = w_hh_ref[...]  # loop-invariant MXU RHS

    def step(t, h):
        hh = jnp.dot(h.astype(mxu_dtype), w_hh,
                     preferred_element_type=jnp.float32)
        return jnp.tanh(xw_scratch[t] + hh)

    h_last = lax.fori_loop(0, T, step, jnp.zeros((Bp, Hp), jnp.float32),
                           unroll=unroll)

    out_ref[...] = (jnp.dot(h_last.astype(mxu_dtype), w_fc_ref[...],
                            preferred_element_type=jnp.float32)
                    + b_fc_ref[...]).astype(out_ref.dtype)


# ---------------------------------------------------------------------------
# Wrapper
# ---------------------------------------------------------------------------
def rnn_model_forward(x, params, *, weight_dtype=jnp.float32,
                      register_vreg_budget=32, unroll=8):
    """x: (B, T, I) batch-first f32 (PyTorch convention). Returns (B, O).

    weight_dtype=jnp.bfloat16 casts only the matmul operands (x, weights, and
    h at the dot) — biases / adds / tanh stay f32 — a v6e/v7x optimization
    that is also safe (if less beneficial) on v5e.
    """
    B, T, I = x.shape
    w_ih, w_hh, b_ih, b_hh, w_fc, b_fc = params
    H = w_hh.shape[0]
    O = w_fc.shape[0]

    # Padded layout: sublane-align batch, lane-align hidden/output.
    Bp = _round_up(B, 8)
    Hp = _round_up(H, 128)
    Op = _round_up(O, 128)

    # Layout glue in plain JAX: time-major, batch pad, pre-transposed weights
    # (kernel does h @ W, no in-kernel transposes), pre-summed RNN biases.
    # TODO(synk): at large T*B fold this transpose/pad into the kernel's DMA
    # by time-chunking the grid with a BlockSpec index_map on the batch-first
    # array (and set vmem_limit_bytes explicitly for v7x's 64 MiB VMEM).
    x_tm = jnp.transpose(x, (1, 0, 2))                        # (T, B, I)
    x_tm = jnp.pad(x_tm, ((0, 0), (0, Bp - B), (0, 0)))       # (T, Bp, I)
    x_flat = x_tm.reshape(T * Bp, I).astype(weight_dtype)     # (T*Bp, I)

    w_ih_p = jnp.pad(w_ih.T, ((0, 0), (0, Hp - H))).astype(weight_dtype)
    w_hh_p = jnp.pad(w_hh.T, ((0, Hp - H), (0, Hp - H))).astype(weight_dtype)
    b_p = jnp.pad((b_ih + b_hh).reshape(1, H), ((0, 0), (0, Hp - H)))
    w_fc_p = jnp.pad(w_fc.T, ((0, Hp - H), (0, Op - O))).astype(weight_dtype)
    b_fc_p = jnp.pad(b_fc.reshape(1, O), ((0, 0), (0, Op - O)))

    wbytes = np.dtype(weight_dtype).itemsize
    cost = pl.CostEstimate(
        flops=2 * T * Bp * Hp * (I + Hp) + 2 * Bp * Hp * Op,
        transcendentals=T * Bp * Hp,
        bytes_accessed=(T * Bp * I * wbytes
                        + (I + Hp + Op) * Hp * wbytes
                        + (Hp + Op) * 4
                        + Bp * Op * 4),
    )

    vmem_spec = pl.BlockSpec(memory_space=pltpu.MemorySpace.VMEM)
    common = dict(
        out_shape=jax.ShapeDtypeStruct((Bp, Op), jnp.float32),
        in_specs=[vmem_spec] * 6,          # pin every operand in VMEM
        out_specs=vmem_spec,
        cost_estimate=cost,
    )
    operands = (x_flat, w_ih_p, w_hh_p, b_p, w_fc_p, b_fc_p)

    # TODO(synk): when Bp >= 16 on v7x, add a leading batch grid axis with
    # dimension_semantics=("parallel", ...) so both TensorCores each run half
    # the batch's independent recurrence.
    if T * Bp * Hp <= register_vreg_budget * 1024:
        # Small: hoisted projection fits in a few dozen vregs -> no scratch.
        out_padded = pl.pallas_call(rnn_fused_reg_kernel, **common)(*operands)
    else:
        # Large: keep xw in VMEM scratch and cap the unroll so the recurrence
        # doesn't explode instruction footprint / spill vregs.
        out_padded = pl.pallas_call(
            functools.partial(rnn_fused_scratch_kernel, unroll=min(unroll, T)),
            scratch_shapes=[pltpu.VMEM((T, Bp, Hp), jnp.float32)],
            **common,
        )(*operands)

    return out_padded[:B, :O]


def init_params(key, input_size, hidden_size, output_size):
    """Deterministic PyTorch-style uniform(-1/sqrt(H), 1/sqrt(H)) init."""
    ks = jax.random.split(key, 6)
    bound = 1.0 / jnp.sqrt(hidden_size)
    w_ih = jax.random.uniform(ks[0], (hidden_size, input_size), jnp.float32,
                              -bound, bound)
    w_hh = jax.random.uniform(ks[1], (hidden_size, hidden_size), jnp.float32,
                              -bound, bound)
    b_ih = jax.random.uniform(ks[2], (hidden_size,), jnp.float32,
                              -bound, bound)
    b_hh = jax.random.uniform(ks[3], (hidden_size,), jnp.float32,
                              -bound, bound)
    w_fc = jax.random.uniform(ks[4], (output_size, hidden_size), jnp.float32,
                              -bound, bound)
    b_fc = jax.random.uniform(ks[5], (output_size,), jnp.float32,
                              -bound, bound)
    return (w_ih, w_hh, b_ih, b_hh, w_fc, b_fc)


def rnn_model_reference(x, params):
    """Pure-JAX reference (lax.scan) matching nn.RNN(tanh) + Linear semantics."""
    w_ih, w_hh, b_ih, b_hh, w_fc, b_fc = params
    B = x.shape[0]
    H = w_hh.shape[0]
    h0 = jnp.zeros((B, H), jnp.float32)

    def step(h, x_t):
        h_new = jnp.tanh(x_t @ w_ih.T + b_ih + h @ w_hh.T + b_hh)
        return h_new, None

    h_last, _ = lax.scan(step, h0, jnp.transpose(x, (1, 0, 2)))
    return h_last @ w_fc.T + b_fc


if __name__ == "__main__":
    # Small shapes consistent with the module's forward.
    batch, seq_len, input_size = 2, 8, 16
    hidden_size, output_size = 32, 4

    key = jax.random.PRNGKey(0)
    k_x, k_p = jax.random.split(key)
    x = jax.random.normal(k_x, (batch, seq_len, input_size), jnp.float32)
    params = init_params(k_p, input_size, hidden_size, output_size)

    ref = rnn_model_reference(x, params)

    # 1) Primary check: f32, register-resident-xw path.
    out = jax.block_until_ready(rnn_model_forward(x, params))
    assert out.shape == (batch, output_size)
    assert jnp.allclose(out, ref, atol=1e-5, rtol=1e-5), "f32 mismatch vs ref"

    # 2) bf16 matmul-operand variant (v6e/v7x optimization); looser tolerance
    #    since the reference stays f32.
    out_bf16 = jax.block_until_ready(
        rnn_model_forward(x, params, weight_dtype=jnp.bfloat16))
    assert out_bf16.shape == (batch, output_size)
    assert jnp.allclose(out_bf16, ref, atol=1e-1, rtol=1e-1), "bf16 mismatch"

    # 3) Larger shapes exercise the VMEM-scratch + capped-unroll fallback.
    B2, T2, I2, H2, O2 = 4, 32, 16, 256, 8
    k_x2, k_p2 = jax.random.split(jax.random.PRNGKey(1))
    x2 = jax.random.normal(k_x2, (B2, T2, I2), jnp.float32)
    params2 = init_params(k_p2, I2, H2, O2)
    out2 = jax.block_until_ready(rnn_model_forward(x2, params2))
    ref2 = rnn_model_reference(x2, params2)
    assert out2.shape == (B2, O2)
    assert jnp.allclose(out2, ref2, atol=1e-3, rtol=1e-3), "scratch-path mismatch"

    print("KERNEL_OK")
</pallas_src>

<mosaic_0001>
module attributes {stable_mosaic.version = 11 : i64} {
  func.func @rnn_fused_reg_kernel(%arg0: memref<64x16xf32, #tpu.memory_space<vmem>>, %arg1: memref<16x128xf32, #tpu.memory_space<vmem>>, %arg2: memref<128x128xf32, #tpu.memory_space<vmem>>, %arg3: memref<1x128xf32, #tpu.memory_space<vmem>>, %arg4: memref<128x128xf32, #tpu.memory_space<vmem>>, %arg5: memref<1x128xf32, #tpu.memory_space<vmem>>, %arg6: memref<8x128xf32, #tpu.memory_space<vmem>>) attributes {dimension_semantics = [], scalar_prefetch = 0 : i64, scratch_operands = 0 : i64, tpu.core_type = #tpu.core_type<tc>} {
    %c0 = arith.constant 0 : index
    %c0_0 = arith.constant 0 : index
    %0 = vector.load %arg0[%c0, %c0_0] : memref<64x16xf32, #tpu.memory_space<vmem>>, vector<64x16xf32>
    %c0_1 = arith.constant 0 : index
    %c0_2 = arith.constant 0 : index
    %1 = vector.load %arg1[%c0_1, %c0_2] : memref<16x128xf32, #tpu.memory_space<vmem>>, vector<16x128xf32>
    %cst = arith.constant dense<0.000000e+00> : vector<64x128xf32>
    %2 = tpu.matmul %0, %1, %cst {dimension_numbers = #tpu.dot_dimension_numbers<[1], [0], [0], [1], [0, 0, 1, 1], [], []>} : vector<64x16xf32>, vector<16x128xf32>, vector<64x128xf32> -> vector<64x128xf32>
    %c0_3 = arith.constant 0 : index
    %c0_4 = arith.constant 0 : index
    %3 = vector.load %arg3[%c0_3, %c0_4] : memref<1x128xf32, #tpu.memory_space<vmem>>, vector<1x128xf32>
    %4 = vector.broadcast %3 : vector<1x128xf32> to vector<64x128xf32>
    %5 = arith.addf %2, %4 : vector<64x128xf32>
    %c0_5 = arith.constant 0 : index
    %c0_6 = arith.constant 0 : index
    %6 = vector.load %arg2[%c0_5, %c0_6] : memref<128x128xf32, #tpu.memory_space<vmem>>, vector<128x128xf32>
    %cst_7 = arith.constant 0.000000e+00 : f32
    %7 = vector.broadcast %cst_7 : f32 to vector<8x128xf32>
    %cst_8 = arith.constant dense<0.000000e+00> : vector<8x128xf32>
    %8 = tpu.matmul %7, %6, %cst_8 {dimension_numbers = #tpu.dot_dimension_numbers<[1], [0], [0], [1], [0, 0, 1, 1], [], []>} : vector<8x128xf32>, vector<128x128xf32>, vector<8x128xf32> -> vector<8x128xf32>
    %9 = vector.extract_strided_slice %5 {offsets = [0, 0], sizes = [8, 128], strides = [1, 1]} : vector<64x128xf32> to vector<8x128xf32>
    %10 = arith.addf %9, %8 : vector<8x128xf32>
    %11 = math.tanh %10 : vector<8x128xf32>
    %cst_9 = arith.constant dense<0.000000e+00> : vector<8x128xf32>
    %12 = tpu.matmul %11, %6, %cst_9 {dimension_numbers = #tpu.dot_dimension_numbers<[1], [0], [0], [1], [0, 0, 1, 1], [], []>} : vector<8x128xf32>, vector<128x128xf32>, vector<8x128xf32> -> vector<8x128xf32>
    %13 = vector.extract_strided_slice %5 {offsets = [8, 0], sizes = [8, 128], strides = [1, 1]} : vector<64x128xf32> to vector<8x128xf32>
    %14 = arith.addf %13, %12 : vector<8x128xf32>
    %15 = math.tanh %14 : vector<8x128xf32>
    %cst_10 = arith.constant dense<0.000000e+00> : vector<8x128xf32>
    %16 = tpu.matmul %15, %6, %cst_10 {dimension_numbers = #tpu.dot_dimension_numbers<[1], [0], [0], [1], [0, 0, 1, 1], [], []>} : vector<8x128xf32>, vector<128x128xf32>, vector<8x128xf32> -> vector<8x128xf32>
    %17 = vector.extract_strided_slice %5 {offsets = [16, 0], sizes = [8, 128], strides = [1, 1]} : vector<64x128xf32> to vector<8x128xf32>
    %18 = arith.addf %17, %16 : vector<8x128xf32>
    %19 = math.tanh %18 : vector<8x128xf32>
    %cst_11 = arith.constant dense<0.000000e+00> : vector<8x128xf32>
    %20 = tpu.matmul %19, %6, %cst_11 {dimension_numbers = #tpu.dot_dimension_numbers<[1], [0], [0], [1], [0, 0, 1, 1], [], []>} : vector<8x128xf32>, vector<128x128xf32>, vector<8x128xf32> -> vector<8x128xf32>
    %21 = vector.extract_strided_slice %5 {offsets = [24, 0], sizes = [8, 128], strides = [1, 1]} : vector<64x128xf32> to vector<8x128xf32>
    %22 = arith.addf %21, %20 : vector<8x128xf32>
    %23 = math.tanh %22 : vector<8x128xf32>
    %cst_12 = arith.constant dense<0.000000e+00> : vector<8x128xf32>
    %24 = tpu.matmul %23, %6, %cst_12 {dimension_numbers = #tpu.dot_dimension_numbers<[1], [0], [0], [1], [0, 0, 1, 1], [], []>} : vector<8x128xf32>, vector<128x128xf32>, vector<8x128xf32> -> vector<8x128xf32>
    %25 = vector.extract_strided_slice %5 {offsets = [32, 0], sizes = [8, 128], strides = [1, 1]} : vector<64x128xf32> to vector<8x128xf32>
    %26 = arith.addf %25, %24 : vector<8x128xf32>
    %27 = math.tanh %26 : vector<8x128xf32>
    %cst_13 = arith.constant dense<0.000000e+00> : vector<8x128xf32>
    %28 = tpu.matmul %27, %6, %cst_13 {dimension_numbers = #tpu.dot_dimension_numbers<[1], [0], [0], [1], [0, 0, 1, 1], [], []>} : vector<8x128xf32>, vector<128x128xf32>, vector<8x128xf32> -> vector<8x128xf32>
    %29 = vector.extract_strided_slice %5 {offsets = [40, 0], sizes = [8, 128], strides = [1, 1]} : vector<64x128xf32> to vector<8x128xf32>
    %30 = arith.addf %29, %28 : vector<8x128xf32>
    %31 = math.tanh %30 : vector<8x128xf32>
    %cst_14 = arith.constant dense<0.000000e+00> : vector<8x128xf32>
    %32 = tpu.matmul %31, %6, %cst_14 {dimension_numbers = #tpu.dot_dimension_numbers<[1], [0], [0], [1], [0, 0, 1, 1], [], []>} : vector<8x128xf32>, vector<128x128xf32>, vector<8x128xf32> -> vector<8x128xf32>
    %33 = vector.extract_strided_slice %5 {offsets = [48, 0], sizes = [8, 128], strides = [1, 1]} : vector<64x128xf32> to vector<8x128xf32>
    %34 = arith.addf %33, %32 : vector<8x128xf32>
    %35 = math.tanh %34 : vector<8x128xf32>
    %cst_15 = arith.constant dense<0.000000e+00> : vector<8x128xf32>
    %36 = tpu.matmul %35, %6, %cst_15 {dimension_numbers = #tpu.dot_dimension_numbers<[1], [0], [0], [1], [0, 0, 1, 1], [], []>} : vector<8x128xf32>, vector<128x128xf32>, vector<8x128xf32> -> vector<8x128xf32>
    %37 = vector.extract_strided_slice %5 {offsets = [56, 0], sizes = [8, 128], strides = [1, 1]} : vector<64x128xf32> to vector<8x128xf32>
    %38 = arith.addf %37, %36 : vector<8x128xf32>
    %39 = math.tanh %38 : vector<8x128xf32>
    %c0_16 = arith.constant 0 : index
    %c0_17 = arith.constant 0 : index
    %40 = vector.load %arg4[%c0_16, %c0_17] : memref<128x128xf32, #tpu.memory_space<vmem>>, vector<128x128xf32>
    %cst_18 = arith.constant dense<0.000000e+00> : vector<8x128xf32>
    %41 = tpu.matmul %39, %40, %cst_18 {dimension_numbers = #tpu.dot_dimension_numbers<[1], [0], [0], [1], [0, 0, 1, 1], [], []>} : vector<8x128xf32>, vector<128x128xf32>, vector<8x128xf32> -> vector<8x128xf32>
    %c0_19 = arith.constant 0 : index
    %c0_20 = arith.constant 0 : index
    %42 = vector.load %arg5[%c0_19, %c0_20] : memref<1x128xf32, #tpu.memory_space<vmem>>, vector<1x128xf32>
    %43 = vector.broadcast %42 : vector<1x128xf32> to vector<8x128xf32>
    %44 = arith.addf %41, %43 : vector<8x128xf32>
    %c0_21 = arith.constant 0 : index
    %c0_22 = arith.constant 0 : index
    %45 = vector.load %arg6[%c0_21, %c0_22] : memref<8x128xf32, #tpu.memory_space<vmem>>, vector<8x128xf32>
    tpu.vector_store %arg6[%c0_21, %c0_22], %44 {strides = array<i32>} : memref<8x128xf32, #tpu.memory_space<vmem>>, vector<8x128xf32>,
    return
  }
}

</mosaic_0001>

<llo_original>
// kernel: tpu_custom_call.1
$region0: #{tpu_custom_call.1}
  #allocation0 [shape = 'u32[]', space=smem, size = 0x4, offset = 0x4, fixed_abs, tag = 'smem constant byte address 0x4 - core index']
  #allocation1 [shape = 'u32[72,128]{1,0:T(1,128)}', space=vmem, size = 0x9000, scoped, tag = 'internal scratch']
  %s0 = inlined_call_operand.vmem [shape: f32[64,16], index: 0, kind: input, shape index: {}]
  %s1 = inlined_call_operand.vmem [shape: f32[16,128], index: 1, kind: input, shape index: {}]
  %s2 = inlined_call_operand.hbm [shape: f32[128,128], index: 2, kind: input, shape index: {}]
  %s3 = inlined_call_operand.vmem [shape: f32[1,128], index: 3, kind: input, shape index: {}]
  %s4 = inlined_call_operand.hbm [shape: f32[128,128], index: 4, kind: input, shape index: {}]
  %s5 = inlined_call_operand.vmem [shape: f32[1,128], index: 5, kind: input, shape index: {}]
  %s6 = inlined_call_operand.hbm [shape: f32[8,128], index: 6, kind: output, shape index: {}]
  %s7 = sld [smem:[#allocation0]]
  $region42: #{tpu_custom_call.1} parent=0
    _
  %s9 = ssub.s32 1, %s7
  %s10 = scalar_select 0, %s9, %s7
  $region1: #{tpu_custom_call.1} parent=0
    #allocation2 [shape = 'u8[65536]{0}', space=vmem, size = 0x10000, scoped, tag = 'input window, operand 2, single buffered']
    #allocation3 [shape = 's32[1]{0}', space=sflag, size = 0x4, scoped, tag = 'scoped memory for tpu_custom_call.1']
    #allocation4 [shape = 's32[1]{0}', space=sflag, size = 0x4, scoped, tag = 'scoped memory for tpu_custom_call.1']
    #allocation5 [shape = 'u8[65536]{0}', space=vmem, size = 0x10000, scoped, tag = 'input window, operand 4, single buffered']
    #allocation6 [shape = 's32[1]{0}', space=sflag, size = 0x4, scoped, tag = 'scoped memory for tpu_custom_call.1']
    #allocation7 [shape = 'u8[4096]{0}', space=vmem, size = 0x1000, scoped, tag = 'output window, operand 0, single buffered']
    %11 = vsyncpa [#allocation3], 0
    %12 = vsyncpa [#allocation6], 0
    %13 = vsyncpa [#allocation4], 0
    // Predicated region
    $region2: #{tpu_custom_call.1} parent=1 // pred_check
      _
    $region3: #{tpu_custom_call.1} parent=1 // pred_check_branch
      %15 = sbr.rel (0) target = $region5
    $region4: #{tpu_custom_call.1} parent=1 // pred_region
      _
    $region5: #{tpu_custom_call.1} parent=1 // pred_fallthru
      _
    // Predicated region
    $region6: #{tpu_custom_call.1} parent=1 // pred_check
      _
    $region7: #{tpu_custom_call.1} parent=1 // pred_check_branch
      %17 = sbr.rel (0) target = $region9
    $region8: #{tpu_custom_call.1} parent=1 // pred_region
      _
    $region9: #{tpu_custom_call.1} parent=1 // pred_fallthru
      _
    // Predicated region
    $region10: #{tpu_custom_call.1} parent=1 // pred_check
      _
    $region11: #{tpu_custom_call.1} parent=1 // pred_check_branch
      %19 = sbr.rel (0) target = $region13
    $region12: #{tpu_custom_call.1} parent=1 // pred_region
      %21 = vsyncadd [#allocation3], 0
      %s22 = sshll.u32 %s2, 4
      %s23 = int_to_ptr.hbm [resolvable:$true] %s22
      %s24 = sshll.u32 [#allocation2], 4
      %s25 = int_to_ptr.vmem [resolvable:$true] %s24
      %30 = dma.hbm_to_vmem [thread:$0]  %s23, 2048, %s25, [#allocation3], 128, 128, 8
    $region13: #{tpu_custom_call.1} parent=1 // pred_fallthru
      _
    // Predicated region
    $region14: #{tpu_custom_call.1} parent=1 // pred_check
      _
    $region15: #{tpu_custom_call.1} parent=1 // pred_check_branch
      %32 = sbr.rel (0) target = $region17
    $region16: #{tpu_custom_call.1} parent=1 // pred_region
      _
    $region17: #{tpu_custom_call.1} parent=1 // pred_fallthru
      _
    // Predicated region
    $region18: #{tpu_custom_call.1} parent=1 // pred_check
      _
    $region19: #{tpu_custom_call.1} parent=1 // pred_check_branch
      %34 = sbr.rel (0) target = $region21
    $region20: #{tpu_custom_call.1} parent=1 // pred_region
      %36 = vsyncadd [#allocation6], 0
      %s37 = sshll.u32 %s4, 4
      %s38 = int_to_ptr.hbm [resolvable:$true] %s37
      %s39 = sshll.u32 [#allocation5], 4
      %s40 = int_to_ptr.vmem [resolvable:$true] %s39
      %45 = dma.hbm_to_vmem [thread:$0]  %s38, 2048, %s40, [#allocation6], 128, 128, 8
    $region21: #{tpu_custom_call.1} parent=1 // pred_fallthru
      _
    // Predicated region
    $region22: #{tpu_custom_call.1} parent=1 // pred_check
      _
    $region23: #{tpu_custom_call.1} parent=1 // pred_check_branch
      %47 = sbr.rel (0) target = $region25
    $region24: #{tpu_custom_call.1} parent=1 // pred_region
      _
    $region25: #{tpu_custom_call.1} parent=1 // pred_fallthru
      _
    // Predicated region
    $region26: #{tpu_custom_call.1} parent=1 // pred_check
      _
    $region27: #{tpu_custom_call.1} parent=1 // pred_check_branch
      %49 = sbr.rel (0) target = $region29
    $region28: #{tpu_custom_call.1} parent=1 // pred_region
      %51 = dma.done [#allocation3], 2048
    $region29: #{tpu_custom_call.1} parent=1 // pred_fallthru
      _
    // Predicated region
    $region30: #{tpu_custom_call.1} parent=1 // pred_check
      _
    $region31: #{tpu_custom_call.1} parent=1 // pred_check_branch
      %53 = sbr.rel (0) target = $region33
    $region32: #{tpu_custom_call.1} parent=1 // pred_region
      %55 = dma.done [#allocation6], 2048
    $region33: #{tpu_custom_call.1} parent=1 // pred_fallthru
      _
    %v56 = vld [vmem:[%s0] sm:$0xff]
    %v57 = vld [vmem:[%s0 + $0x8] sm:$0xff]
    %v58 = vld [vmem:[%s0 + $0x10] sm:$0xff]
    %v59 = vld [vmem:[%s0 + $0x18] sm:$0xff]
    %v60 = vld [vmem:[%s0 + $0x20] sm:$0xff]
    %v61 = vld [vmem:[%s0 + $0x28] sm:$0xff]
    %v62 = vld [vmem:[%s0 + $0x30] sm:$0xff]
    %v63 = vld [vmem:[%s0 + $0x38] sm:$0xff]
    %v64 = vld [vmem:[%s1] sm:$0xff]
    %v65 = vld [vmem:[%s1 + $0x8] sm:$0xff]
    %v66 = vld [vmem:[%s3] sm:$0x1]
    %v68 = vperm.slane %v66, 0
    %vm70 = vcmask 130048
    %v72 = vsel %vm70, %v56, 0
    %v75 = vsel %vm70, %v57, 0
    %v78 = vsel %vm70, %v58, 0
    %v81 = vsel %vm70, %v59, 0
    %v84 = vsel %vm70, %v60, 0
    %v87 = vsel %vm70, %v61, 0
    %v90 = vsel %vm70, %v62, 0
    %v93 = vsel %vm70, %v63, 0
    %95 = vmatpush.msra.mxu0 0.0
    %96 = vmatpush.msra.mxu0 0.0
    %97 = vmatpush.msra.mxu0 0.0
    %98 = vmatpush.msra.mxu0 0.0
    %99 = vmatpush.msra.mxu0 0.0
    %100 = vmatpush.msra.mxu0 0.0
    %101 = vmatpush.msra.mxu0 0.0
    %102 = vmatpush.msra.mxu0 0.0
    %103 = vmatpush.msra.mxu0 0.0
    %104 = vmatpush.msra.mxu0 0.0
    %105 = vmatpush.msra.mxu0 0.0
    %106 = vmatpush.msra.mxu0 0.0
    %107 = vmatpush.msra.mxu0 0.0
    %108 = vmatpush.msra.mxu0 0.0
    %109 = vmatpush.msra.mxu0 %v65
    %110 = vmatpush.msra.mxu0 %v64
    %111 = vmatmul.f32.gmra.mxu0 %v72
    %v112 = vpop.f32.mrf.mxu0
    %v113 = vadd.f32 %v68, %v112
    %114 = vmatmul.f32.gmra.mxu0 %v75
    %v115 = vpop.f32.mrf.mxu0
    %v116 = vadd.f32 %v68, %v115
    %117 = vmatmul.f32.gmra.mxu0 %v78
    %v118 = vpop.f32.mrf.mxu0
    %v119 = vadd.f32 %v68, %v118
    %120 = vmatmul.f32.gmra.mxu0 %v81
    %v121 = vpop.f32.mrf.mxu0
    %v122 = vadd.f32 %v68, %v121
    %123 = vmatmul.f32.gmra.mxu0 %v84
    %v124 = vpop.f32.mrf.mxu0
    %v125 = vadd.f32 %v68, %v124
    %126 = vmatmul.f32.gmra.mxu0 %v87
    %v127 = vpop.f32.mrf.mxu0
    %v128 = vadd.f32 %v68, %v127
    %129 = vmatmul.f32.gmra.mxu0 %v90
    %v130 = vpop.f32.mrf.mxu0
    %v131 = vadd.f32 %v68, %v130
    %132 = vmatmul.f32.gmra.mxu0 %v93
    %v133 = vpop.f32.mrf.mxu0
    %v134 = vadd.f32 %v68, %v133
    %135 = vdwg.mxu0
    %v136 = vld [vmem:[#allocation2] sm:$0xff]
    %v137 = vld [vmem:[#allocation2 + $0x8] sm:$0xff]
    %v138 = vld [vmem:[#allocation2 + $0x10] sm:$0xff]
    %v139 = vld [vmem:[#allocation2 + $0x18] sm:$0xff]
    %v140 = vld [vmem:[#allocation2 + $0x20] sm:$0xff]
    %v141 = vld [vmem:[#allocation2 + $0x28] sm:$0xff]
    %v142 = vld [vmem:[#allocation2 + $0x30] sm:$0xff]
    %v143 = vld [vmem:[#allocation2 + $0x38] sm:$0xff]
    %v144 = vld [vmem:[#allocation2 + $0x40] sm:$0xff]
    %v145 = vld [vmem:[#allocation2 + $0x48] sm:$0xff]
    %v146 = vld [vmem:[#allocation2 + $0x50] sm:$0xff]
    %v147 = vld [vmem:[#allocation2 + $0x58] sm:$0xff]
    %v148 = vld [vmem:[#allocation2 + $0x60] sm:$0xff]
    %v149 = vld [vmem:[#allocation2 + $0x68] sm:$0xff]
    %v150 = vld [vmem:[#allocation2 + $0x70] sm:$0xff]
    %v151 = vld [vmem:[#allocation2 + $0x78] sm:$0xff]
    %152 = vmatpush.msra.mxu0 %v151
    %153 = vmatpush.msra.mxu0 %v150
    %154 = vmatpush.msra.mxu0 %v149
    %155 = vmatpush.msra.mxu0 %v148
    %156 = vmatpush.msra.mxu0 %v147
    %157 = vmatpush.msra.mxu0 %v146
    %158 = vmatpush.msra.mxu0 %v145
    %159 = vmatpush.msra.mxu0 %v144
    %160 = vmatpush.msra.mxu0 %v143
    %161 = vmatpush.msra.mxu0 %v142
    %162 = vmatpush.msra.mxu0 %v141
    %163 = vmatpush.msra.mxu0 %v140
    %164 = vmatpush.msra.mxu0 %v139
    %165 = vmatpush.msra.mxu0 %v138
    %166 = vmatpush.msra.mxu0 %v137
    %167 = vmatpush.msra.mxu0 %v136
    %168 = vmatmul.f32.gmra.mxu0 0.0
    %v169 = vpop.f32.mrf.mxu0
    %v170 = vadd.f32 0.0, %v169
    %171 = vdwg.mxu0
    %v172 = vadd.f32 %v113, %v170
    %v173 = vtanh.pop %v172
    %174 = vmatpush.msra.mxu0 %v151
    %175 = vmatpush.msra.mxu0 %v150
    %176 = vmatpush.msra.mxu0 %v149
    %177 = vmatpush.msra.mxu0 %v148
    %178 = vmatpush.msra.mxu0 %v147
    %179 = vmatpush.msra.mxu0 %v146
    %180 = vmatpush.msra.mxu0 %v145
    %181 = vmatpush.msra.mxu0 %v144
    %182 = vmatpush.msra.mxu0 %v143
    %183 = vmatpush.msra.mxu0 %v142
    %184 = vmatpush.msra.mxu0 %v141
    %185 = vmatpush.msra.mxu0 %v140
    %186 = vmatpush.msra.mxu0 %v139
    %187 = vmatpush.msra.mxu0 %v138
    %188 = vmatpush.msra.mxu0 %v137
    %189 = vmatpush.msra.mxu0 %v136
    %190 = vmatmul.f32.gmra.mxu0 %v173
    %v191 = vpop.f32.mrf.mxu0
    %v192 = vadd.f32 0.0, %v191
    %193 = vdwg.mxu0
    %v194 = vadd.f32 %v116, %v192
    %v195 = vtanh.pop %v194
    %196 = vmatpush.msra.mxu0 %v151
    %197 = vmatpush.msra.mxu0 %v150
    %198 = vmatpush.msra.mxu0 %v149
    %199 = vmatpush.msra.mxu0 %v148
    %200 = vmatpush.msra.mxu0 %v147
    %201 = vmatpush.msra.mxu0 %v146
    %202 = vmatpush.msra.mxu0 %v145
    %203 = vmatpush.msra.mxu0 %v144
    %204 = vmatpush.msra.mxu0 %v143
    %205 = vmatpush.msra.mxu0 %v142
    %206 = vmatpush.msra.mxu0 %v141
    %207 = vmatpush.msra.mxu0 %v140
    %208 = vmatpush.msra.mxu0 %v139
    %209 = vmatpush.msra.mxu0 %v138
    %210 = vmatpush.msra.mxu0 %v137
    %211 = vmatpush.msra.mxu0 %v136
    %212 = vmatmul.f32.gmra.mxu0 %v195
    %v213 = vpop.f32.mrf.mxu0
    %v214 = vadd.f32 0.0, %v213
    %215 = vdwg.mxu0
    %v216 = vadd.f32 %v119, %v214
    %v217 = vtanh.pop %v216
    %218 = vmatpush.msra.mxu0 %v151
    %219 = vmatpush.msra.mxu0 %v150
    %220 = vmatpush.msra.mxu0 %v149
    %221 = vmatpush.msra.mxu0 %v148
    %222 = vmatpush.msra.mxu0 %v147
    %223 = vmatpush.msra.mxu0 %v146
    %224 = vmatpush.msra.mxu0 %v145
    %225 = vmatpush.msra.mxu0 %v144
    %226 = vmatpush.msra.mxu0 %v143
    %227 = vmatpush.msra.mxu0 %v142
    %228 = vmatpush.msra.mxu0 %v141
    %229 = vmatpush.msra.mxu0 %v140
    %230 = vmatpush.msra.mxu0 %v139
    %231 = vmatpush.msra.mxu0 %v138
    %232 = vmatpush.msra.mxu0 %v137
    %233 = vmatpush.msra.mxu0 %v136
    %234 = vmatmul.f32.gmra.mxu0 %v217
    %v235 = vpop.f32.mrf.mxu0
    %v236 = vadd.f32 0.0, %v235
    %237 = vdwg.mxu0
    %v238 = vadd.f32 %v122, %v236
    %v239 = vtanh.pop %v238
    %240 = vmatpush.msra.mxu0 %v151
    %241 = vmatpush.msra.mxu0 %v150
    %242 = vmatpush.msra.mxu0 %v149
    %243 = vmatpush.msra.mxu0 %v148
    %244 = vmatpush.msra.mxu0 %v147
    %245 = vmatpush.msra.mxu0 %v146
    %246 = vmatpush.msra.mxu0 %v145
    %247 = vmatpush.msra.mxu0 %v144
    %248 = vmatpush.msra.mxu0 %v143
    %249 = vmatpush.msra.mxu0 %v142
    %250 = vmatpush.msra.mxu0 %v141
    %251 = vmatpush.msra.mxu0 %v140
    %252 = vmatpush.msra.mxu0 %v139
    %253 = vmatpush.msra.mxu0 %v138
    %254 = vmatpush.msra.mxu0 %v137
    %255 = vmatpush.msra.mxu0 %v136
    %256 = vmatmul.f32.gmra.mxu0 %v239
    %v257 = vpop.f32.mrf.mxu0
    %v258 = vadd.f32 0.0, %v257
    %259 = vdwg.mxu0
    %v260 = vadd.f32 %v125, %v258
    %v261 = vtanh.pop %v260
    %262 = vmatpush.msra.mxu0 %v151
    %263 = vmatpush.msra.mxu0 %v150
    %264 = vmatpush.msra.mxu0 %v149
    %265 = vmatpush.msra.mxu0 %v148
    %266 = vmatpush.msra.mxu0 %v147
    %267 = vmatpush.msra.mxu0 %v146
    %268 = vmatpush.msra.mxu0 %v145
    %269 = vmatpush.msra.mxu0 %v144
    %270 = vmatpush.msra.mxu0 %v143
    %271 = vmatpush.msra.mxu0 %v142
    %272 = vmatpush.msra.mxu0 %v141
    %273 = vmatpush.msra.mxu0 %v140
    %274 = vmatpush.msra.mxu0 %v139
    %275 = vmatpush.msra.mxu0 %v138
    %276 = vmatpush.msra.mxu0 %v137
    %277 = vmatpush.msra.mxu0 %v136
    %278 = vmatmul.f32.gmra.mxu0 %v261
    %v279 = vpop.f32.mrf.mxu0
    %v280 = vadd.f32 0.0, %v279
    %281 = vdwg.mxu0
    %v282 = vadd.f32 %v128, %v280
    %v283 = vtanh.pop %v282
    %284 = vmatpush.msra.mxu0 %v151
    %285 = vmatpush.msra.mxu0 %v150
    %286 = vmatpush.msra.mxu0 %v149
    %287 = vmatpush.msra.mxu0 %v148
    %288 = vmatpush.msra.mxu0 %v147
    %289 = vmatpush.msra.mxu0 %v146
    %290 = vmatpush.msra.mxu0 %v145
    %291 = vmatpush.msra.mxu0 %v144
    %292 = vmatpush.msra.mxu0 %v143
    %293 = vmatpush.msra.mxu0 %v142
    %294 = vmatpush.msra.mxu0 %v141
    %295 = vmatpush.msra.mxu0 %v140
    %296 = vmatpush.msra.mxu0 %v139
    %297 = vmatpush.msra.mxu0 %v138
    %298 = vmatpush.msra.mxu0 %v137
    %299 = vmatpush.msra.mxu0 %v136
    %300 = vmatmul.f32.gmra.mxu0 %v283
    %v301 = vpop.f32.mrf.mxu0
    %v302 = vadd.f32 0.0, %v301
    %303 = vdwg.mxu0
    %v304 = vadd.f32 %v131, %v302
    %v305 = vtanh.pop %v304
    %306 = vmatpush.msra.mxu0 %v151
    %307 = vmatpush.msra.mxu0 %v150
    %308 = vmatpush.msra.mxu0 %v149
    %309 = vmatpush.msra.mxu0 %v148
    %310 = vmatpush.msra.mxu0 %v147
    %311 = vmatpush.msra.mxu0 %v146
    %312 = vmatpush.msra.mxu0 %v145
    %313 = vmatpush.msra.mxu0 %v144
    %314 = vmatpush.msra.mxu0 %v143
    %315 = vmatpush.msra.mxu0 %v142
    %316 = vmatpush.msra.mxu0 %v141
    %317 = vmatpush.msra.mxu0 %v140
    %318 = vmatpush.msra.mxu0 %v139
    %319 = vmatpush.msra.mxu0 %v138
    %320 = vmatpush.msra.mxu0 %v137
    %321 = vmatpush.msra.mxu0 %v136
    %322 = vmatmul.f32.gmra.mxu0 %v305
    %v323 = vpop.f32.mrf.mxu0
    %v324 = vadd.f32 0.0, %v323
    %325 = vdwg.mxu0
    %v326 = vadd.f32 %v134, %v324
    %v327 = vtanh.pop %v326
    %v328 = vld [vmem:[#allocation5] sm:$0xff]
    %v329 = vld [vmem:[#allocation5 + $0x8] sm:$0xff]
    %v330 = vld [vmem:[#allocation5 + $0x10] sm:$0xff]
    %v331 = vld [vmem:[#allocation5 + $0x18] sm:$0xff]
    %v332 = vld [vmem:[#allocation5 + $0x20] sm:$0xff]
    %v333 = vld [vmem:[#allocation5 + $0x28] sm:$0xff]
    %v334 = vld [vmem:[#allocation5 + $0x30] sm:$0xff]
    %v335 = vld [vmem:[#allocation5 + $0x38] sm:$0xff]
    %v336 = vld [vmem:[#allocation5 + $0x40] sm:$0xff]
    %v337 = vld [vmem:[#allocation5 + $0x48] sm:$0xff]
    %v338 = vld [vmem:[#allocation5 + $0x50] sm:$0xff]
    %v339 = vld [vmem:[#allocation5 + $0x58] sm:$0xff]
    %v340 = vld [vmem:[#allocation5 + $0x60] sm:$0xff]
    %v341 = vld [vmem:[#allocation5 + $0x68] sm:$0xff]
    %v342 = vld [vmem:[#allocation5 + $0x70] sm:$0xff]
    %v343 = vld [vmem:[#allocation5 + $0x78] sm:$0xff]
    %v344 = vld [vmem:[%s5] sm:$0x1]
    %v346 = vperm.slane %v344, 0
    %348 = vmatpush.msra.mxu0 %v343
    %349 = vmatpush.msra.mxu0 %v342
    %350 = vmatpush.msra.mxu0 %v341
    %351 = vmatpush.msra.mxu0 %v340
    %352 = vmatpush.msra.mxu0 %v339
    %353 = vmatpush.msra.mxu0 %v338
    %354 = vmatpush.msra.mxu0 %v337
    %355 = vmatpush.msra.mxu0 %v336
    %356 = vmatpush.msra.mxu0 %v335
    %357 = vmatpush.msra.mxu0 %v334
    %358 = vmatpush.msra.mxu0 %v333
    %359 = vmatpush.msra.mxu0 %v332
    %360 = vmatpush.msra.mxu0 %v331
    %361 = vmatpush.msra.mxu0 %v330
    %362 = vmatpush.msra.mxu0 %v329
    %363 = vmatpush.msra.mxu0 %v328
    %364 = vmatmul.f32.gmra.mxu0 %v327
    %v365 = vpop.f32.mrf.mxu0
    %v366 = vadd.f32 %v346, %v365
    %367 = vdwg.mxu0
    %368 = vst [vmem:[#allocation7] sm:$0xff] %v366
    // Predicated region
    $region34: #{tpu_custom_call.1} parent=1 // pred_check
      _
    $region35: #{tpu_custom_call.1} parent=1 // pred_check_branch
      %370 = sbr.rel (0) target = $region37
    $region36: #{tpu_custom_call.1} parent=1 // pred_region
      %372 = vsyncadd [#allocation4], 0
      %s374 = sshll.u32 [#allocation7], 4
      %s375 = int_to_ptr.vmem [resolvable:$true] %s374
      %s376 = sshll.u32 %s6, 4
      %s377 = int_to_ptr.hbm [resolvable:$true] %s376
      %379 = dma.vmem_to_hbm [thread:$0]  %s375, 128, %s377, [#allocation4]
    $region37: #{tpu_custom_call.1} parent=1 // pred_fallthru
      _
    // Predicated region
    $region38: #{tpu_custom_call.1} parent=1 // pred_check
      _
    $region39: #{tpu_custom_call.1} parent=1 // pred_check_branch
      %381 = sbr.rel (0) target = $region41
    $region40: #{tpu_custom_call.1} parent=1 // pred_region
      %383 = dma.done [#allocation4], 128
    $region41: #{tpu_custom_call.1} parent=1 // pred_fallthru
      _
    %384 = vsyncpa [#allocation3], 1
    %385 = vsyncpa [#allocation6], 1
    %386 = vsyncpa [#allocation4], 1

</llo_original>
